<compile_context>
chip_gen: v6e
topology: v6e:2x2x1
jax: 0.10.0
libtpu: 0.0.40
codegen_flags: <defaults>
</compile_context>

<pallas_src>
import functools

import jax
import jax.numpy as jnp
from jax.experimental import pallas as pl
from jax.experimental.pallas import tpu as pltpu


def _round_up(x: int, m: int) -> int:
    return (x + m - 1) // m * m


def _vmem_budgets():
    """Returns (tile-sizing budget, explicit scoped-VMEM limit) in bytes,
    derived from the actual chip's per-core VMEM capacity."""
    try:
        cap = int(pltpu.get_tpu_info().vmem_capacity_bytes)
    except Exception:
        cap = 64 * 1024 * 1024  # conservative fallback (v7x-sized per-core VMEM)
    tile_budget = int(cap * 0.45)   # double-buffered inputs + f32 temporaries
    vmem_limit = int(cap * 0.70)    # leave headroom for compiler scratch
    return tile_budget, vmem_limit


def _supports_bf16_eup() -> bool:
    """True on chips with a bf16 EUP (v6e / v7x and newer); False on <= v5."""
    try:
        kind = jax.devices()[0].device_kind.lower()
    except Exception:
        return False
    return not any(v in kind for v in ("v2", "v3", "v4", "v5"))


def _choose_block_b(B: int, C: int, itemsize: int, requested, budget: int) -> int:
    """Largest batch tile (multiple of 8) whose double-buffered working set
    fits in `budget`, optionally capped by `requested`, and clamped so the
    grid keeps >=2 steps (v7x megacore) when the batch allows it."""
    # 2 inputs x 2 pipeline buffers at input dtype + ~5 f32 temporaries / row.
    per_row = C * (4 * itemsize + 5 * 4)
    cap = max(8, (budget // per_row) // 8 * 8)
    tb = min(cap, _round_up(B, 8))
    if requested is not None:
        tb = min(tb, max(8, _round_up(int(requested), 8)))
    if B > 8:
        # Prefer >=2 grid steps so the "parallel" axis can use both v7x cores.
        tb = min(tb, max(8, _round_up(B, 16) // 2))
    return max(8, (tb // 8) * 8)


def _kl_distill_kernel(s_ref, t_ref, o_ref, *, inv_temp: float, exp_dtype):
    # Load the (tb, C) tiles; all shifts / sums / accumulation in f32.
    s = s_ref[...].astype(jnp.float32) * inv_temp
    t = t_ref[...].astype(jnp.float32) * inv_temp

    # Student: shifted logits + logsumexp only (log_q is never materialized).
    s_max = jnp.max(s, axis=1, keepdims=True)
    s_sh = s - s_max
    s_exp = jnp.exp(s_sh.astype(exp_dtype)).astype(jnp.float32)
    s_lse = jnp.log(jnp.sum(s_exp, axis=1, keepdims=True))        # (tb, 1)

    # Teacher: shifted exps and per-row sums only (no per-element divide,
    # no materialized p / log_p).
    t_max = jnp.max(t, axis=1, keepdims=True)
    t_sh = t - t_max
    t_exp = jnp.exp(t_sh.astype(exp_dtype)).astype(jnp.float32)   # (tb, C)
    t_sum = jnp.sum(t_exp, axis=1, keepdims=True)                 # (tb, 1)

    # Folded KL per row:
    #   sum_c p*(log p - log q)
    #     = (1/t_sum) * sum_c t_exp*(t_sh - s_sh) + s_lse - log(t_sum)
    inner = jnp.sum(t_exp * (t_sh - s_sh), axis=1, keepdims=True)  # (tb, 1)
    inv_t_sum = pl.reciprocal(t_sum, approx=True)                  # EUP vrcp
    o_ref[...] = inner * inv_t_sum + s_lse - jnp.log(t_sum)

    # Per-row partials; scalar collapse + T**2 / B scaling happen outside.
    # (Zero-padded rows give uniform-vs-uniform KL == 0 exactly.)


def kl_distillation_loss(student_logits, teacher_logits, temperature: float = 1.0,
                         block_b=None, exp_in_bf16: bool = False):
    """Pallas implementation of KLDistillationLoss.forward. Returns a scalar."""
    assert student_logits.shape == teacher_logits.shape
    assert student_logits.ndim == 2
    B, C = student_logits.shape
    itemsize = jnp.dtype(student_logits.dtype).itemsize

    tile_budget, vmem_limit = _vmem_budgets()
    tb = _choose_block_b(B, C, itemsize, block_b, tile_budget)
    b_pad = _round_up(B, tb)

    if b_pad != B:
        # Zero rows contribute exactly 0 KL, so padding needs no masking.
        pad = ((0, b_pad - B), (0, 0))
        student_logits = jnp.pad(student_logits, pad)
        teacher_logits = jnp.pad(teacher_logits, pad)

    kernel = functools.partial(
        _kl_distill_kernel,
        inv_temp=1.0 / float(temperature),
        exp_dtype=jnp.bfloat16 if exp_in_bf16 else jnp.float32)

    cost = pl.CostEstimate(
        flops=8 * b_pad * C,
        transcendentals=2 * b_pad * C,
        bytes_accessed=2 * b_pad * C * itemsize + b_pad * 4)

    row_kl = pl.pallas_call(
        kernel,
        out_shape=jax.ShapeDtypeStruct((b_pad, 1), jnp.float32),
        grid=(b_pad // tb,),
        in_specs=[
            pl.BlockSpec((tb, C), lambda i: (i, 0)),
            pl.BlockSpec((tb, C), lambda i: (i, 0)),
        ],
        out_specs=pl.BlockSpec((tb, 1), lambda i: (i, 0)),
        compiler_params=pltpu.CompilerParams(
            dimension_semantics=("parallel",),
            vmem_limit_bytes=vmem_limit),
        cost_estimate=cost,
    )(student_logits, teacher_logits)

    # Tiny final reduction + one constant for the batchmean / T**2 scaling,
    # using the GLOBAL (unpadded) batch size.
    scale = float(temperature) ** 2 / B
    return jnp.sum(row_kl) * scale


def _reference(student_logits, teacher_logits, temperature: float = 1.0):
    # Pure-JAX reference matching torch.nn.KLDivLoss(reduction='batchmean').
    s = student_logits.astype(jnp.float32) / temperature
    t = teacher_logits.astype(jnp.float32) / temperature
    log_q = jax.nn.log_softmax(s, axis=1)
    log_p = jax.nn.log_softmax(t, axis=1)
    p = jnp.exp(log_p)
    kl = jnp.sum(p * (log_p - log_q)) / student_logits.shape[0]
    return kl * temperature ** 2


if __name__ == "__main__":
    key = jax.random.PRNGKey(0)
    k1, k2, k3, k4, k5, k6, k7, k8 = jax.random.split(key, 8)
    temperature = 2.0

    # Case 1: f32 inputs, multi-tile grid (B=32, C=256, forced 8-row tiles).
    B, C = 32, 256
    student = jax.random.normal(k1, (B, C), dtype=jnp.float32)
    teacher = jax.random.normal(k2, (B, C), dtype=jnp.float32)
    loss = jax.block_until_ready(
        kl_distillation_loss(student, teacher, temperature, block_b=8))
    ref = _reference(student, teacher, temperature)
    assert jnp.allclose(loss, ref, rtol=5e-3, atol=5e-3), (loss, ref)

    # Case 2: ragged batch (B=10 -> zero-padded), auto tile sizing.
    B2, C2 = 10, 128
    student2 = jax.random.normal(k3, (B2, C2), dtype=jnp.float32)
    teacher2 = jax.random.normal(k4, (B2, C2), dtype=jnp.float32)
    loss2 = jax.block_until_ready(
        kl_distillation_loss(student2, teacher2, temperature))
    ref2 = _reference(student2, teacher2, temperature)
    assert jnp.allclose(loss2, ref2, rtol=5e-3, atol=5e-3), (loss2, ref2)

    # Case 3: bf16 inputs (half the HBM traffic), f32 math inside the kernel.
    B3, C3 = 24, 128
    student3 = jax.random.normal(k5, (B3, C3), dtype=jnp.bfloat16)
    teacher3 = jax.random.normal(k6, (B3, C3), dtype=jnp.bfloat16)
    loss3 = jax.block_until_ready(
        kl_distillation_loss(student3, teacher3, temperature, block_b=8))
    ref3 = _reference(student3, teacher3, temperature)
    assert jnp.allclose(loss3, ref3, rtol=5e-3, atol=5e-3), (loss3, ref3)

    # Case 4: bf16-EUP exp path (only auto-enabled on chips with bf16 EUP,
    # i.e. not v2-v5); looser tolerance since exp is evaluated in bf16.
    B4, C4 = 16, 512
    student4 = jax.random.normal(k7, (B4, C4), dtype=jnp.bfloat16)
    teacher4 = jax.random.normal(k8, (B4, C4), dtype=jnp.bfloat16)
    loss4 = jax.block_until_ready(
        kl_distillation_loss(student4, teacher4, temperature,
                             exp_in_bf16=_supports_bf16_eup()))
    ref4 = _reference(student4, teacher4, temperature)
    assert jnp.allclose(loss4, ref4, rtol=5e-2, atol=5e-2), (loss4, ref4)

    print("KERNEL_OK")
</pallas_src>

<mosaic_0001>
module attributes {stable_mosaic.version = 11 : i64} {
  func.func @_kl_distill_kernel(%arg0: i32, %arg1: memref<8x256xf32, #tpu.memory_space<vmem>>, %arg2: memref<8x256xf32, #tpu.memory_space<vmem>>, %arg3: memref<8x1xf32, #tpu.memory_space<vmem>>) attributes {dimension_semantics = [#tpu.dimension_semantics<parallel>], iteration_bounds = array<i64: 4>, scalar_prefetch = 0 : i64, scratch_operands = 0 : i64, tpu.core_type = #tpu.core_type<tc>, window_params = [{transform_indices = @transform_0, window_bounds = array<i64: 8, 256>}, {transform_indices = @transform_1, window_bounds = array<i64: 8, 256>}, {transform_indices = @transform_2, window_bounds = array<i64: 8, 1>}]} {
    %c0 = arith.constant 0 : index
    %c0_0 = arith.constant 0 : index
    %0 = vector.load %arg1[%c0, %c0_0] : memref<8x256xf32, #tpu.memory_space<vmem>>, vector<8x256xf32>
    %cst = arith.constant 5.000000e-01 : f32
    %1 = vector.broadcast %cst : f32 to vector<8x256xf32>
    %2 = arith.mulf %0, %1 : vector<8x256xf32>
    %c0_1 = arith.constant 0 : index
    %c0_2 = arith.constant 0 : index
    %3 = vector.load %arg2[%c0_1, %c0_2] : memref<8x256xf32, #tpu.memory_space<vmem>>, vector<8x256xf32>
    %cst_3 = arith.constant 5.000000e-01 : f32
    %4 = vector.broadcast %cst_3 : f32 to vector<8x256xf32>
    %5 = arith.mulf %3, %4 : vector<8x256xf32>
    %cst_4 = arith.constant dense<0xFF800000> : vector<8xf32>
    %6 = vector.multi_reduction <maximumf>, %2, %cst_4 [1] : vector<8x256xf32> to vector<8xf32>
    %7 = vector.shape_cast %6 : vector<8xf32> to vector<8x1xf32>
    %8 = vector.broadcast %7 : vector<8x1xf32> to vector<8x256xf32>
    %9 = arith.subf %2, %8 : vector<8x256xf32>
    %10 = math.exp %9 : vector<8x256xf32>
    %cst_5 = arith.constant dense<0.000000e+00> : vector<8xf32>
    %11 = vector.multi_reduction <add>, %10, %cst_5 [1] : vector<8x256xf32> to vector<8xf32>
    %12 = vector.shape_cast %11 : vector<8xf32> to vector<8x1xf32>
    %13 = math.log %12 : vector<8x1xf32>
    %cst_6 = arith.constant dense<0xFF800000> : vector<8xf32>
    %14 = vector.multi_reduction <maximumf>, %5, %cst_6 [1] : vector<8x256xf32> to vector<8xf32>
    %15 = vector.shape_cast %14 : vector<8xf32> to vector<8x1xf32>
    %16 = vector.broadcast %15 : vector<8x1xf32> to vector<8x256xf32>
    %17 = arith.subf %5, %16 : vector<8x256xf32>
    %18 = math.exp %17 : vector<8x256xf32>
    %cst_7 = arith.constant dense<0.000000e+00> : vector<8xf32>
    %19 = vector.multi_reduction <add>, %18, %cst_7 [1] : vector<8x256xf32> to vector<8xf32>
    %20 = vector.shape_cast %19 : vector<8xf32> to vector<8x1xf32>
    %21 = arith.subf %17, %9 : vector<8x256xf32>
    %22 = arith.mulf %18, %21 : vector<8x256xf32>
    %cst_8 = arith.constant dense<0.000000e+00> : vector<8xf32>
    %23 = vector.multi_reduction <add>, %22, %cst_8 [1] : vector<8x256xf32> to vector<8xf32>
    %24 = vector.shape_cast %23 : vector<8xf32> to vector<8x1xf32>
    %25 = tpu.reciprocal %20 {approx = true} : vector<8x1xf32> -> vector<8x1xf32>
    %26 = arith.mulf %24, %25 : vector<8x1xf32>
    %27 = arith.addf %26, %13 : vector<8x1xf32>
    %28 = math.log %20 : vector<8x1xf32>
    %29 = arith.subf %27, %28 : vector<8x1xf32>
    %c0_9 = arith.constant 0 : index
    %c0_10 = arith.constant 0 : index
    %30 = vector.load %arg3[%c0_9, %c0_10] : memref<8x1xf32, #tpu.memory_space<vmem>>, vector<8x1xf32>
    tpu.vector_store %arg3[%c0_9, %c0_10], %29 {strides = array<i32>} : memref<8x1xf32, #tpu.memory_space<vmem>>, vector<8x1xf32>,
    return
  }
  func.func @transform_0(%arg0: i32) -> (i32, i32) {
    %c0_i32 = arith.constant 0 : i32
    %c0_i32_0 = arith.constant 0 : i32
    return %arg0, %c0_i32 : i32, i32
  }
  func.func @transform_1(%arg0: i32) -> (i32, i32) {
    %c0_i32 = arith.constant 0 : i32
    %c0_i32_0 = arith.constant 0 : i32
    return %arg0, %c0_i32 : i32, i32
  }
  func.func @transform_2(%arg0: i32) -> (i32, i32) {
    %c0_i32 = arith.constant 0 : i32
    %c0_i32_0 = arith.constant 0 : i32
    return %arg0, %c0_i32 : i32, i32
  }
}

</mosaic_0001>

<llo_original>
// kernel: tpu_custom_call.1
$region0: #{tpu_custom_call.1}
  #allocation0 [shape = 'u32[]', space=smem, size = 0x4, offset = 0x4, fixed_abs, tag = 'smem constant byte address 0x4 - core index']
  #allocation1 [shape = 'u32[144,128]{1,0:T(1,128)}', space=vmem, size = 0x12000, scoped, tag = 'internal scratch']
  %s0 = inlined_call_operand.hbm [shape: f32[32,256], index: 0, kind: input, shape index: {}]
  %s1 = inlined_call_operand.hbm [shape: f32[32,256], index: 1, kind: input, shape index: {}]
  %s2 = inlined_call_operand.vmem [shape: f32[32,1], index: 2, kind: output, shape index: {}]
  %s3 = sld [smem:[#allocation0]]
  $region49: #{tpu_custom_call.1} parent=0
    _
  %s5 = ssub.s32 1, %s3
  %s6 = scalar_select 0, %s5, %s3
  $region1: #{tpu_custom_call.1} parent=0
    #allocation2 [shape = 'u8[16384]{0}', space=vmem, size = 0x4000, scoped, tag = 'input window, operand 0']
    #allocation3 [shape = 's32[2]{0}', space=sflag, size = 0x8, scoped, tag = 'scoped memory for tpu_custom_call.1']
    #allocation4 [shape = 'u8[16384]{0}', space=vmem, size = 0x4000, scoped, tag = 'input window, operand 1']
    #allocation5 [shape = 's32[2]{0}', space=sflag, size = 0x8, scoped, tag = 'scoped memory for tpu_custom_call.1']
    %7 = vsyncpa [#allocation3], 0
    %s8 = scalar_lea.sflag [#allocation3], 1
    %9 = vsyncpa %s8, 0
    %10 = vsyncpa [#allocation5], 0
    %s11 = scalar_lea.sflag [#allocation5], 1
    %12 = vsyncpa %s11, 0
    loop: start=0, step=1, limit=6
    $region2: #{tpu_custom_call.1} parent=1 // loop_pre_header
      _
    $region3: #{tpu_custom_call.1} parent=1 // loop_header
      %s14 = sphi 0, %s18
      %p15 = scmp.ge.s32.totalorder %s14, 6
      %s24 = sphi 0, %s26
      %s27 = sphi 0, %s24
      %s28 = sphi 0, %s27
      %s44 = sphi 0, %s28
      %s50 = sphi 0, %s52
      %s53 = sphi 0, %s50
      %s54 = sphi 0, %s53
      %s70 = sphi 0, %s54
      %s76 = sphi 0, %s78
      %s79 = sphi 0, %s76
      %s80 = sphi 0, %s79
      %s96 = sphi 0, %s80
    $region4: #{tpu_custom_call.1} parent=1 // loop_header_branch
      %17 = sbr.rel (%p15) target = $region8
    $region5: #{tpu_custom_call.1} parent=1 // loop_body
      %s19 = ssub.s32 %s14, 1
      %s20 = ssub.s32 %s14, 2
      %s21 = sadd.s32 %s14, 1
      %s22 = ssub.s32 %s14, %s21
      %p23 = scmp.eq.s32.totalorder %s22, 0
      %s25 = sadd.s32 %s24, 1
      %s26 = scalar_select %p23, %s24, %s25
      %p29 = pneg %p23
      %p30 = scmp.eq.s32.totalorder %s14, 3
      %p31 = por %p29, %p30
      %p32 = scmp.ne.s32.totalorder %s24, %s27
      %p33 = scmp.eq.s32.totalorder %s14, 0
      %p34 = por %p32, %p33
      %p35 = scmp.ne.s32.totalorder %s24, %s27
      %p36 = scmp.eq.s32.totalorder %s19, 3
      %p37 = por %p35, %p36
      %p38 = scmp.ne.s32.totalorder %s27, %s28
      %p39 = scmp.eq.s32.totalorder %s19, 0
      %p40 = por %p38, %p39
      %p41 = scmp.ne.s32.totalorder %s27, %s28
      %p42 = scmp.eq.s32.totalorder %s20, 3
      %p43 = por %p41, %p42
      %p45 = scmp.ne.s32.totalorder %s28, %s44
      %p46 = scmp.eq.s32.totalorder %s20, 0
      %p47 = por %p45, %p46
      %s48 = ssub.s32 %s14, %s21
      %p49 = scmp.eq.s32.totalorder %s48, 0
      %s51 = sadd.s32 %s50, 1
      %s52 = scalar_select %p49, %s50, %s51
      %p55 = pneg %p49
      %p56 = scmp.eq.s32.totalorder %s14, 3
      %p57 = por %p55, %p56
      %p58 = scmp.ne.s32.totalorder %s50, %s53
      %p59 = scmp.eq.s32.totalorder %s14, 0
      %p60 = por %p58, %p59
      %p61 = scmp.ne.s32.totalorder %s50, %s53
      %p62 = scmp.eq.s32.totalorder %s19, 3
      %p63 = por %p61, %p62
      %p64 = scmp.ne.s32.totalorder %s53, %s54
      %p65 = scmp.eq.s32.totalorder %s19, 0
      %p66 = por %p64, %p65
      %p67 = scmp.ne.s32.totalorder %s53, %s54
      %p68 = scmp.eq.s32.totalorder %s20, 3
      %p69 = por %p67, %p68
      %p71 = scmp.ne.s32.totalorder %s54, %s70
      %p72 = scmp.eq.s32.totalorder %s20, 0
      %p73 = por %p71, %p72
      %s74 = ssub.s32 %s14, %s21
      %p75 = scmp.eq.s32.totalorder %s74, 0
      %s77 = sadd.s32 %s76, 1
      %s78 = scalar_select %p75, %s76, %s77
      %p81 = pneg %p75
      %p82 = scmp.eq.s32.totalorder %s14, 3
      %p83 = por %p81, %p82
      %p84 = scmp.ne.s32.totalorder %s76, %s79
      %p85 = scmp.eq.s32.totalorder %s14, 0
      %p86 = por %p84, %p85
      %p87 = scmp.ne.s32.totalorder %s76, %s79
      %p88 = scmp.eq.s32.totalorder %s19, 3
      %p89 = por %p87, %p88
      %p90 = scmp.ne.s32.totalorder %s79, %s80
      %p91 = scmp.eq.s32.totalorder %s19, 0
      %p92 = por %p90, %p91
      %p93 = scmp.ne.s32.totalorder %s79, %s80
      %p94 = scmp.eq.s32.totalorder %s20, 3
      %p95 = por %p93, %p94
      %p97 = scmp.ne.s32.totalorder %s80, %s96
      %p98 = scmp.eq.s32.totalorder %s20, 0
      %p99 = por %p97, %p98
      %p100 = scmp.le.s32.totalorder 1, %s14
      %p101 = scmp.lt.s32.totalorder %s14, 5
      %p102 = pnand %p100, %p101
      %p103 = pneg %p102
      // Predicated region
      $region9: #{tpu_custom_call.1} parent=5 // pred_check
        _
      $region10: #{tpu_custom_call.1} parent=5 // pred_check_branch
        %105 = sbr.rel (%p102) target = $region12
      $region11: #{tpu_custom_call.1} parent=5 // pred_region
        %s106 = ssub.s32 %s14, 1
      $region12: #{tpu_custom_call.1} parent=5 // pred_fallthru
        _
      %p107 = scmp.lt.s32.totalorder %s14, 4
      // Predicated region
      $region13: #{tpu_custom_call.1} parent=5 // pred_check
        %p108 = pneg %p107
      $region14: #{tpu_custom_call.1} parent=5 // pred_check_branch
        %110 = sbr.rel (%p108) target = $region16
      $region15: #{tpu_custom_call.1} parent=5 // pred_region
        // Predicated region
        $region17: #{tpu_custom_call.1} parent=15 // pred_check
          %p111 = pneg %p34
        $region18: #{tpu_custom_call.1} parent=15 // pred_check_branch
          %113 = sbr.rel (%p111) target = $region20
        $region19: #{tpu_custom_call.1} parent=15 // pred_region
          %s114 = sand.u32 %s24, 1
          %s115 = scalar_lea.sflag [#allocation3], %s114
          %s116 = sand.u32 %s24, 1
          %s117 = smul.addr %s116, 16
          %s118 = scalar_lea.vmem [#allocation2], %s117
          %s120 = ssub.s32 256, 256
          %121 = vsyncadd %s115, %s120
          %s122 = smul.addr %s14, 2
          %s123 = smul.addr %s122, 128
          %s124 = scalar_lea.hbm %s0, %s123
          %s126 = sshll.u32 %s118, 4
          %s127 = int_to_ptr.vmem [resolvable:$true] %s126
          %129 = dma.hbm_to_vmem [thread:$0]  %s124, 256, %s127, %s115
        $region20: #{tpu_custom_call.1} parent=15 // pred_fallthru
          _
        // Predicated region
        $region21: #{tpu_custom_call.1} parent=15 // pred_check
          %p130 = pneg %p60
        $region22: #{tpu_custom_call.1} parent=15 // pred_check_branch
          %132 = sbr.rel (%p130) target = $region24
        $region23: #{tpu_custom_call.1} parent=15 // pred_region
          %s133 = sand.u32 %s50, 1
          %s134 = scalar_lea.sflag [#allocation5], %s133
          %s135 = sand.u32 %s50, 1
          %s136 = smul.addr %s135, 16
          %s137 = scalar_lea.vmem [#allocation4], %s136
          %s139 = ssub.s32 256, 256
          %140 = vsyncadd %s134, %s139
          %s141 = smul.addr %s14, 2
          %s142 = smul.addr %s141, 128
          %s143 = scalar_lea.hbm %s1, %s142
          %s145 = sshll.u32 %s137, 4
          %s146 = int_to_ptr.vmem [resolvable:$true] %s145
          %148 = dma.hbm_to_vmem [thread:$0]  %s143, 256, %s146, %s134
        $region24: #{tpu_custom_call.1} parent=15 // pred_fallthru
          _
      $region16: #{tpu_custom_call.1} parent=5 // pred_fallthru
        _
      %p149 = scmp.le.s32.totalorder 1, %s14
      %p150 = scmp.lt.s32.totalorder %s14, 5
      %p151 = pnand %p149, %p150
      %p152 = pneg %p151
      // Predicated region
      $region25: #{tpu_custom_call.1} parent=5 // pred_check
        _
      $region26: #{tpu_custom_call.1} parent=5 // pred_check_branch
        %154 = sbr.rel (%p151) target = $region28
      $region27: #{tpu_custom_call.1} parent=5 // pred_region
        %s155 = ssub.s32 %s14, 1
        %s156 = sand.u32 %s27, 1
        %s157 = scalar_lea.sflag [#allocation3], %s156
        %s158 = sand.u32 %s27, 1
        %s159 = smul.addr %s158, 16
        %s160 = scalar_lea.vmem [#allocation2], %s159
        // Predicated region
        $region29: #{tpu_custom_call.1} parent=27 // pred_check
          %p161 = pneg %p40
        $region30: #{tpu_custom_call.1} parent=27 // pred_check_branch
          %163 = sbr.rel (%p161) target = $region32
        $region31: #{tpu_custom_call.1} parent=27 // pred_region
          %164 = dma.done %s157, 256
        $region32: #{tpu_custom_call.1} parent=27 // pred_fallthru
          _
        %s165 = sand.u32 %s53, 1
        %s166 = scalar_lea.sflag [#allocation5], %s165
        %s167 = sand.u32 %s53, 1
        %s168 = smul.addr %s167, 16
        %s169 = scalar_lea.vmem [#allocation4], %s168
        // Predicated region
        $region33: #{tpu_custom_call.1} parent=27 // pred_check
          %p170 = pneg %p66
        $region34: #{tpu_custom_call.1} parent=27 // pred_check_branch
          %172 = sbr.rel (%p170) target = $region36
        $region35: #{tpu_custom_call.1} parent=27 // pred_region
          %173 = dma.done %s166, 256
        $region36: #{tpu_custom_call.1} parent=27 // pred_fallthru
          _
        %s174 = sand.u32 %s27, 1
        %s175 = scalar_lea.sflag [#allocation3], %s174
        %s176 = sand.u32 %s27, 1
        %s177 = smul.addr %s176, 16
        %s178 = scalar_lea.vmem [#allocation2], %s177
        %p179 = pneg %p40
        %p180 = pneg %p37
        %s181 = sand.u32 %s53, 1
        %s182 = scalar_lea.sflag [#allocation5], %s181
        %s183 = sand.u32 %s53, 1
        %s184 = smul.addr %s183, 16
        %s185 = scalar_lea.vmem [#allocation4], %s184
        %p186 = pneg %p66
        %p187 = pneg %p63
        %p188 = pneg %p92
        %p189 = pneg %p89
        %p190 = scmp.lt.s32.totalorder %s19, 3
        %s191 = scalar_select %p190, %s19, 3
        %s192 = smul.addr %s191, 8
        %s193 = scalar_lea.vmem %s2, %s192
        %p194 = scmp.lt.s32.totalorder %s19, 3
        %s195 = scalar_select %p194, %s19, 3
        %s196 = smul.addr %s195, 8
        %s197 = scalar_lea.vmem %s2, %s196
        %v198 = vld [vmem:[%s160] sm:$0xff]
        %v199 = vld [vmem:[%s160 + $0x8] sm:$0xff]
        %v200 = vmul.f32 %v198, 0.5
        %v201 = vmul.f32 %v199, 0.5
        %v202 = vld [vmem:[%s169] sm:$0xff]
        %v203 = vld [vmem:[%s169 + $0x8] sm:$0xff]
        %v204 = vmul.f32 %v202, 0.5
        %v205 = vmul.f32 %v203, 0.5
        %v206 = vmax.f32 %v200, %v201
        %207 = vmax.xlane.f32.xlu0 %v206
        %v208 = vpop.xlane.xlu0 %207
        %v209 = vsub.f32 %v200, %v208
        %v210 = vsub.f32 %v201, %v208
        %v211 = vmul.f32 %v209, 1.442695
        %v212 = vpow.pop %v211
        %v213 = vmul.f32 %v210, 1.442695
        %v214 = vpow.pop %v213
        %v215 = vadd.f32 %v212, %v214
        %216 = vadd.xlane.f32.xlu0 %v215
        %v217 = vpop.xlane.xlu0 %216
        %v218 = vlog2.pop %v217
        %v219 = vmul.f32 %v218, 0.6931472
        %v220 = vmax.f32 %v204, %v205
        %221 = vmax.xlane.f32.xlu0 %v220
        %v222 = vpop.xlane.xlu0 %221
        %v223 = vsub.f32 %v204, %v222
        %v224 = vsub.f32 %v205, %v222
        %v225 = vmul.f32 %v223, 1.442695
        %v226 = vpow.pop %v225
        %v227 = vmul.f32 %v224, 1.442695
        %v228 = vpow.pop %v227
        %v229 = vadd.f32 %v226, %v228
        %230 = vadd.xlane.f32.xlu0 %v229
        %v231 = vpop.xlane.xlu0 %230
        %v232 = vsub.f32 %v223, %v209
        %v233 = vsub.f32 %v224, %v210
        %v234 = vmul.f32 %v226, %v232
        %v235 = vmul.f32 %v228, %v233
        %v236 = vadd.f32 %v234, %v235
        %237 = vadd.xlane.f32.xlu0 %v236
        %v238 = vpop.xlane.xlu0 %237
        %v239 = vrcp.pop %v231
        %v240 = vmul.f32 %v238, %v239
        %v241 = vadd.f32 %v240, %v219
        %v242 = vlog2.pop %v231
        %v243 = vmul.f32 %v242, 0.6931472
        %v244 = vsub.f32 %v241, %v243
        %vm245 = vcmask 7168
        %246 = vst.msk [vmem:[%s197] sm:$0xff] %vm245, %v244
        %p247 = scmp.lt.s32.totalorder %s19, 3
        %s248 = scalar_select %p247, %s19, 3
        %s249 = smul.addr %s248, 8
        %s250 = scalar_lea.vmem %s2, %s249
        // Predicated region
        $region37: #{tpu_custom_call.1} parent=27 // pred_check
          %p251 = pneg %p89
        $region38: #{tpu_custom_call.1} parent=27 // pred_check_branch
          %253 = sbr.rel (%p251) target = $region40
        $region39: #{tpu_custom_call.1} parent=27 // pred_region
          _
        $region40: #{tpu_custom_call.1} parent=27 // pred_fallthru
          _
      $region28: #{tpu_custom_call.1} parent=5 // pred_fallthru
        _
      %p254 = scmp.le.s32.totalorder 2, %s14
      // Predicated region
      $region41: #{tpu_custom_call.1} parent=5 // pred_check
        %p255 = pneg %p254
      $region42: #{tpu_custom_call.1} parent=5 // pred_check_branch
        %257 = sbr.rel (%p255) target = $region44
      $region43: #{tpu_custom_call.1} parent=5 // pred_region
        %s258 = ssub.s32 %s14, 2
        // Predicated region
        $region45: #{tpu_custom_call.1} parent=43 // pred_check
          %p259 = pneg %p95
        $region46: #{tpu_custom_call.1} parent=43 // pred_check_branch
          %261 = sbr.rel (%p259) target = $region48
        $region47: #{tpu_custom_call.1} parent=43 // pred_region
          %p262 = scmp.lt.s32.totalorder %s20, 3
          %s263 = scalar_select %p262, %s20, 3
          %s264 = smul.addr %s263, 8
          %s265 = scalar_lea.vmem %s2, %s264
        $region48: #{tpu_custom_call.1} parent=43 // pred_fallthru
          _
      $region44: #{tpu_custom_call.1} parent=5 // pred_fallthru
        _
    $region6: #{tpu_custom_call.1} parent=1 // loop_footer
      %s18 = sadd.s32 1, %s14
    $region7: #{tpu_custom_call.1} parent=1 // loop_footer_branch
      %13 = sbr.rel target = $region3
    $region8: #{tpu_custom_call.1} parent=1 // loop_exit
      _
    %266 = vsyncpa [#allocation3], 1
    %s267 = scalar_lea.sflag [#allocation3], 1
    %268 = vsyncpa %s267, 1
    %269 = vsyncpa [#allocation5], 1
    %s270 = scalar_lea.sflag [#allocation5], 1
    %271 = vsyncpa %s270, 1

</llo_original>
